<compile_context>
chip_gen: v6e
topology: v6e:2x2x1
jax: 0.10.0
libtpu: 0.0.40
codegen_flags: <defaults>
</compile_context>

<pallas_src>
import math
from functools import partial
from typing import NamedTuple, Optional

import jax
import jax.numpy as jnp
from jax import lax
from jax.experimental import pallas as pl
from jax.experimental.pallas import tpu as pltpu

LN_EPS = 1e-5
_INV_SQRT2 = 0.7071067811865476          # 1/sqrt(2)
_SQRT_2_OVER_PI = 0.7978845608028654     # sqrt(2/pi)
_MIB = 1024 * 1024


# ----------------------------------------------------------------------------
# Small helpers
# ----------------------------------------------------------------------------
def _cdiv(a, b):
    return (a + b - 1) // b


def _round_down8(x):
    return max(8, (x // 8) * 8)


def _tpu_generation() -> Optional[int]:
    """Best-effort TPU generation (5/6/7/...) from device_kind; None if unknown."""
    try:
        kind = jax.devices()[0].device_kind.lower()
    except Exception:
        return None
    for g in (7, 6, 5, 4):
        if f"v{g}" in kind:
            return g
    return None


def _chip_config():
    gen = _tpu_generation()
    if gen is not None and gen >= 7:
        # v7x: 64 MiB VMEM per TC, 2 TensorCores per chip.
        return dict(gen=gen, vmem_cap=48 * _MIB, multi_tc=True, x_buffers=2,
                    bf16_vpu=True)
    if gen == 6:
        return dict(gen=6, vmem_cap=96 * _MIB, multi_tc=False, x_buffers=2,
                    bf16_vpu=True)
    if gen == 5:
        # v5e: lowest HBM BW -> deeper activation pipelining; no bf16 VPU/EUP.
        return dict(gen=5, vmem_cap=96 * _MIB, multi_tc=False, x_buffers=3,
                    bf16_vpu=False)
    # Unknown: conservative VMEM budget (safe on every generation).
    return dict(gen=None, vmem_cap=48 * _MIB, multi_tc=False, x_buffers=2,
                bf16_vpu=True)


def _block_spec(shape, index_map, buffers=None):
    """BlockSpec with optional pipeline_mode=pl.Buffered(n), with a safe fallback."""
    if buffers is not None and hasattr(pl, "Buffered"):
        try:
            return pl.BlockSpec(shape, index_map, pipeline_mode=pl.Buffered(buffers))
        except TypeError:  # older pallas without pipeline_mode
            pass
    return pl.BlockSpec(shape, index_map)


# ----------------------------------------------------------------------------
# Parameter preparation (done ONCE, cached by the caller)
# ----------------------------------------------------------------------------
class FFParams(NamedTuple):
    gamma: jax.Array   # (1, D) f32 LayerNorm weight
    beta: jax.Array    # (1, D) f32 LayerNorm bias
    w1: jax.Array      # (D, H) matmul dtype
    b1: jax.Array      # (1, H) f32
    w2: jax.Array      # (H, D) matmul dtype
    b2: jax.Array      # (1, D) f32


def prepare_ff_params(params, *, use_bf16_matmul=True) -> FFParams:
    """Cast/reshape once so per-call HBM traffic is just the kernel's own DMA."""
    g, b, w1, b1, w2, b2 = params
    D, H = w1.shape
    mm_dtype = jnp.bfloat16 if use_bf16_matmul else w1.dtype
    return FFParams(
        gamma=g.reshape(1, D).astype(jnp.float32),
        beta=b.reshape(1, D).astype(jnp.float32),
        w1=w1.astype(mm_dtype),
        b1=b1.reshape(1, H).astype(jnp.float32),
        w2=w2.astype(mm_dtype),
        b2=b2.reshape(1, D).astype(jnp.float32),
    )


# ----------------------------------------------------------------------------
# Kernel
# ----------------------------------------------------------------------------
def _ff_kernel(x_ref, g_ref, b_ref, w1_ref, b1_ref, w2_ref, b2_ref, o_ref, *,
               valid_rows, block_rows, hidden_dtype, gelu_tanh):
    # x_ref: (TR, D) tile of flattened values (rows = B*N on sublanes, D on lanes).
    x = x_ref[...].astype(jnp.float32)

    # Ragged tail: zero out garbage rows (OOB output writes are dropped by the
    # pipeline, but masking keeps LN/GELU free of inf/NaN and deterministic).
    if valid_rows is not None:
        row = (pl.program_id(0) * block_rows
               + lax.broadcasted_iota(jnp.int32, (block_rows, 1), 0))
        x = jnp.where(row < valid_rows, x, 0.0)

    # LayerNorm over the feature (lane) dim — f32 on the VPU.
    mu = jnp.mean(x, axis=-1, keepdims=True)
    xc = x - mu
    var = jnp.mean(xc * xc, axis=-1, keepdims=True)
    xn = xc * lax.rsqrt(var + LN_EPS)
    xn = xn * g_ref[...] + b_ref[...]

    # Linear(dim -> mult*dim): MXU operands in weight dtype, f32 accumulation.
    h = jnp.dot(xn.astype(w1_ref.dtype), w1_ref[...],
                preferred_element_type=jnp.float32)

    if gelu_tanh:
        # Fast path: bias-add + tanh-approx GELU in `hidden_dtype` (bf16 on
        # v6e/v7x -> 2x wider VALU, EUP tanh co-issues with MXU work).
        h = (h + b1_ref[...]).astype(hidden_dtype)
        inner = jnp.asarray(_SQRT_2_OVER_PI, hidden_dtype) * (
            h + jnp.asarray(0.044715, hidden_dtype) * h * h * h)
        h = 0.5 * h * (1.0 + jnp.tanh(inner))
    else:
        # Exact GELU (matches torch.nn.GELU default), kept in f32.
        h = h + b1_ref[...]
        h = 0.5 * h * (1.0 + lax.erf(h * _INV_SQRT2))

    # Linear(mult*dim -> dim).
    y = jnp.dot(h.astype(w2_ref.dtype), w2_ref[...],
                preferred_element_type=jnp.float32)
    y = y + b2_ref[...]

    # Residual in f32, single cast on store.
    o_ref[...] = (y + x).astype(o_ref.dtype)


# ----------------------------------------------------------------------------
# Sizing
# ----------------------------------------------------------------------------
def _vmem_estimate(tr, D, H, x_bytes, w_bytes, x_buffers):
    io = (x_buffers + 2) * tr * D * x_bytes            # activation in + out buffers
    weights = 2 * D * H * w_bytes + (3 * D + H) * 4    # single-buffered residents
    interm = 2 * tr * D * 4 + 2 * tr * H * 4           # xn/y f32, hidden f32
    return io + weights + interm


def _pick_tile_rows(rows, tile_rows, D, H, x_bytes, w_bytes, cfg):
    if rows <= 8:
        return rows                                    # one full-extent block
    tr = _round_down8(min(int(tile_rows), rows))
    # v7x: make sure both TensorCores get work (>= 2 grid programs).
    if cfg["multi_tc"] and _cdiv(rows, tr) < 2:
        tr = _round_down8(_cdiv(rows, 2))
    # Shrink until the VMEM estimate fits the per-generation budget.
    while tr > 8 and _vmem_estimate(tr, D, H, x_bytes, w_bytes,
                                    cfg["x_buffers"]) > cfg["vmem_cap"]:
        tr = _round_down8(tr // 2)
    return tr


# ----------------------------------------------------------------------------
# Wrappers
# ----------------------------------------------------------------------------
def feedforward_values(values, ff_params: FFParams, *, tile_rows=512,
                       gelu_tanh=False, vmem_limit_bytes=None):
    """values: (B, N, D). Returns (B, N, D) = FFN(values) + values."""
    B, N, D = values.shape
    D1, H = ff_params.w1.shape
    assert D1 == D and ff_params.w2.shape == (H, D)

    cfg = _chip_config()
    x_bytes = jnp.dtype(values.dtype).itemsize
    w_bytes = jnp.dtype(ff_params.w1.dtype).itemsize

    rows = B * N
    x2d = values.reshape(rows, D)

    tr = _pick_tile_rows(rows, tile_rows, D, H, x_bytes, w_bytes, cfg)
    grid = (_cdiv(rows, tr),)
    ragged = (rows % tr) != 0

    # bf16 elementwise on the hidden tensor only on chips with a bf16 VPU/EUP
    # and only when the matmuls already run in bf16 (fast/tanh path).
    hidden_dtype = (jnp.bfloat16
                    if (cfg["bf16_vpu"] and ff_params.w1.dtype == jnp.bfloat16)
                    else jnp.float32)

    if vmem_limit_bytes is None:
        est = _vmem_estimate(tr, D, H, x_bytes, w_bytes, cfg["x_buffers"])
        vmem_limit_bytes = int(min(cfg["vmem_cap"], max(32 * _MIB, 2 * est)))

    kernel = partial(_ff_kernel,
                     valid_rows=rows if ragged else None,
                     block_rows=tr,
                     hidden_dtype=hidden_dtype,
                     gelu_tanh=gelu_tanh)

    const = lambda i: (0, 0)  # constant index_map: DMA'd once, stays resident
    x_buffers = cfg["x_buffers"] if (cfg["x_buffers"] != 2
                                     and grid[0] >= cfg["x_buffers"]) else None

    out = pl.pallas_call(
        kernel,
        out_shape=jax.ShapeDtypeStruct((rows, D), values.dtype),
        grid_spec=pltpu.PrefetchScalarGridSpec(
            num_scalar_prefetch=0,
            grid=grid,
            in_specs=[
                _block_spec((tr, D), lambda i: (i, 0), buffers=x_buffers),  # x tile
                _block_spec((1, D), const, buffers=1),   # LN gamma (resident)
                _block_spec((1, D), const, buffers=1),   # LN beta
                _block_spec((D, H), const, buffers=1),   # W1
                _block_spec((1, H), const, buffers=1),   # b1
                _block_spec((H, D), const, buffers=1),   # W2
                _block_spec((1, D), const, buffers=1),   # b2
            ],
            out_specs=pl.BlockSpec((tr, D), lambda i: (i, 0)),
        ),
        compiler_params=pltpu.CompilerParams(
            dimension_semantics=("parallel",),
            vmem_limit_bytes=vmem_limit_bytes,
        ),
    )(x2d, ff_params.gamma, ff_params.beta, ff_params.w1, ff_params.b1,
      ff_params.w2, ff_params.b2)

    return out.reshape(B, N, D)


def feedforward(inp, ff_params: FFParams, **kw):
    """inp = (coords, values, mask, edges); only values is transformed."""
    coords, values, mask, edges = inp
    new_values = feedforward_values(values, ff_params, **kw)
    return (coords, new_values, mask, edges)


# ----------------------------------------------------------------------------
# Pure-JAX reference (PyTorch-exact math)
# ----------------------------------------------------------------------------
def _reference(values, params):
    g, b, w1, b1, w2, b2 = params
    x = values.astype(jnp.float32)
    mu = jnp.mean(x, axis=-1, keepdims=True)
    var = jnp.mean((x - mu) ** 2, axis=-1, keepdims=True)
    xn = (x - mu) * lax.rsqrt(var + LN_EPS) * g + b
    h = jnp.dot(xn, w1, precision=lax.Precision.HIGHEST) + b1
    h = 0.5 * h * (1.0 + lax.erf(h * _INV_SQRT2))
    y = jnp.dot(h, w2, precision=lax.Precision.HIGHEST) + b2
    return (y + x).astype(values.dtype)


if __name__ == "__main__":
    key = jax.random.PRNGKey(0)
    B, N, D, MULT = 2, 8, 32, 4
    H = MULT * D

    ks = jax.random.split(key, 8)
    coords = jax.random.normal(ks[0], (B, N, 3), jnp.float32)
    values = jax.random.normal(ks[1], (B, N, D), jnp.float32)
    mask = jnp.ones((B, N), jnp.bool_)
    edges = jax.random.normal(ks[2], (B, N, N), jnp.float32)

    # Deterministic synthetic parameters (shapes per nn.LayerNorm / nn.Linear).
    g = 1.0 + 0.02 * jax.random.normal(ks[3], (D,), jnp.float32)   # LN weight
    b = 0.02 * jax.random.normal(ks[4], (D,), jnp.float32)         # LN bias
    w1 = jax.random.normal(ks[5], (D, H), jnp.float32) / math.sqrt(D)
    b1 = 0.01 * jnp.arange(H, dtype=jnp.float32)
    w2 = jax.random.normal(ks[6], (H, D), jnp.float32) / math.sqrt(H)
    b2 = 0.01 * jnp.arange(D, dtype=jnp.float32)
    params = (g, b, w1, b1, w2, b2)

    ref = _reference(values, params)

    # Parameters are prepared (cast / reshaped) ONCE and reused across calls.
    p_f32 = prepare_ff_params(params, use_bf16_matmul=False)
    p_bf16 = prepare_ff_params(params, use_bf16_matmul=True)

    # 1) Full-precision path: must match the PyTorch-exact reference tightly.
    out_f32 = feedforward((coords, values, mask, edges), p_f32)
    out_f32 = jax.tree_util.tree_map(jax.block_until_ready, out_f32)
    c32, v32, m32, e32 = out_f32
    assert v32.shape == (B, N, D)
    assert jnp.allclose(v32, ref, atol=1e-3, rtol=1e-3), "f32 path mismatch"
    assert jnp.array_equal(c32, coords)
    assert jnp.array_equal(e32, edges)

    # 2) Default production path (bf16 MXU, f32 accumulate, exact erf GELU).
    out_bf = feedforward((coords, values, mask, edges), p_bf16)
    out_bf = jax.tree_util.tree_map(jax.block_until_ready, out_bf)
    _, vbf, _, _ = out_bf
    assert jnp.allclose(vbf, ref, atol=5e-2, rtol=5e-2), "bf16 path mismatch"

    # 3) Fast path: tanh-approx GELU + bf16 elementwise hidden (looser check).
    v_fast = feedforward_values(values, p_bf16, gelu_tanh=True)
    v_fast = jax.block_until_ready(v_fast)
    assert jnp.allclose(v_fast, ref, atol=1e-1, rtol=1e-1), "fast path mismatch"

    # 4) Ragged-rows path: rows not a multiple of the tile (masked tail, no
    #    wrapper pad/slice round trip).
    B3, N3 = 3, 5
    v3 = jax.random.normal(ks[7], (B3, N3, D), jnp.float32)
    out3 = feedforward_values(v3, p_f32, tile_rows=8)
    out3 = jax.block_until_ready(out3)
    assert jnp.allclose(out3, _reference(v3, params), atol=1e-3, rtol=1e-3), \
        "ragged-rows path mismatch"

    print("KERNEL_OK")
</pallas_src>

<mosaic_0001>
module attributes {stable_mosaic.version = 11 : i64} {
  func.func @_ff_kernel(%arg0: i32, %arg1: memref<16x32xf32, #tpu.memory_space<vmem>>, %arg2: memref<1x32xf32, #tpu.memory_space<vmem>>, %arg3: memref<1x32xf32, #tpu.memory_space<vmem>>, %arg4: memref<32x128xf32, #tpu.memory_space<vmem>>, %arg5: memref<1x128xf32, #tpu.memory_space<vmem>>, %arg6: memref<128x32xf32, #tpu.memory_space<vmem>>, %arg7: memref<1x32xf32, #tpu.memory_space<vmem>>, %arg8: memref<16x32xf32, #tpu.memory_space<vmem>>) attributes {dimension_semantics = [#tpu.dimension_semantics<parallel>], iteration_bounds = array<i64: 1>, scalar_prefetch = 0 : i64, scratch_operands = 0 : i64, tpu.core_type = #tpu.core_type<tc>, window_params = [{transform_indices = @transform_0, window_bounds = array<i64: 16, 32>}, {pipeline_mode = #tpu.pipeline_mode<synchronous>, transform_indices = @transform_1, window_bounds = array<i64: 1, 32>}, {pipeline_mode = #tpu.pipeline_mode<synchronous>, transform_indices = @transform_2, window_bounds = array<i64: 1, 32>}, {pipeline_mode = #tpu.pipeline_mode<synchronous>, transform_indices = @transform_3, window_bounds = array<i64: 32, 128>}, {pipeline_mode = #tpu.pipeline_mode<synchronous>, transform_indices = @transform_4, window_bounds = array<i64: 1, 128>}, {pipeline_mode = #tpu.pipeline_mode<synchronous>, transform_indices = @transform_5, window_bounds = array<i64: 128, 32>}, {pipeline_mode = #tpu.pipeline_mode<synchronous>, transform_indices = @transform_6, window_bounds = array<i64: 1, 32>}, {transform_indices = @transform_7, window_bounds = array<i64: 16, 32>}]} {
    %c0 = arith.constant 0 : index
    %c0_0 = arith.constant 0 : index
    %0 = vector.load %arg1[%c0, %c0_0] : memref<16x32xf32, #tpu.memory_space<vmem>>, vector<16x32xf32>
    %cst = arith.constant dense<0.000000e+00> : vector<16xf32>
    %1 = vector.multi_reduction <add>, %0, %cst [1] : vector<16x32xf32> to vector<16xf32>
    %2 = vector.shape_cast %1 : vector<16xf32> to vector<16x1xf32>
    %cst_1 = arith.constant 3.200000e+01 : f32
    %3 = vector.broadcast %cst_1 : f32 to vector<16x1xf32>
    %4 = arith.divf %2, %3 : vector<16x1xf32>
    %5 = vector.broadcast %4 : vector<16x1xf32> to vector<16x32xf32>
    %6 = arith.subf %0, %5 : vector<16x32xf32>
    %7 = arith.mulf %6, %6 : vector<16x32xf32>
    %cst_2 = arith.constant dense<0.000000e+00> : vector<16xf32>
    %8 = vector.multi_reduction <add>, %7, %cst_2 [1] : vector<16x32xf32> to vector<16xf32>
    %9 = vector.shape_cast %8 : vector<16xf32> to vector<16x1xf32>
    %cst_3 = arith.constant 3.200000e+01 : f32
    %10 = vector.broadcast %cst_3 : f32 to vector<16x1xf32>
    %11 = arith.divf %9, %10 : vector<16x1xf32>
    %cst_4 = arith.constant 9.99999974E-6 : f32
    %12 = vector.broadcast %cst_4 : f32 to vector<16x1xf32>
    %13 = arith.addf %11, %12 : vector<16x1xf32>
    %14 = math.rsqrt %13 : vector<16x1xf32>
    %15 = vector.broadcast %14 : vector<16x1xf32> to vector<16x32xf32>
    %16 = arith.mulf %6, %15 : vector<16x32xf32>
    %c0_5 = arith.constant 0 : index
    %c0_6 = arith.constant 0 : index
    %17 = vector.load %arg2[%c0_5, %c0_6] : memref<1x32xf32, #tpu.memory_space<vmem>>, vector<1x32xf32>
    %18 = vector.broadcast %17 : vector<1x32xf32> to vector<16x32xf32>
    %19 = arith.mulf %16, %18 : vector<16x32xf32>
    %c0_7 = arith.constant 0 : index
    %c0_8 = arith.constant 0 : index
    %20 = vector.load %arg3[%c0_7, %c0_8] : memref<1x32xf32, #tpu.memory_space<vmem>>, vector<1x32xf32>
    %21 = vector.broadcast %20 : vector<1x32xf32> to vector<16x32xf32>
    %22 = arith.addf %19, %21 : vector<16x32xf32>
    %c0_9 = arith.constant 0 : index
    %c0_10 = arith.constant 0 : index
    %23 = vector.load %arg4[%c0_9, %c0_10] : memref<32x128xf32, #tpu.memory_space<vmem>>, vector<32x128xf32>
    %cst_11 = arith.constant dense<0.000000e+00> : vector<16x128xf32>
    %24 = tpu.matmul %22, %23, %cst_11 {dimension_numbers = #tpu.dot_dimension_numbers<[1], [0], [0], [1], [0, 0, 1, 1], [], []>} : vector<16x32xf32>, vector<32x128xf32>, vector<16x128xf32> -> vector<16x128xf32>
    %c0_12 = arith.constant 0 : index
    %c0_13 = arith.constant 0 : index
    %25 = vector.load %arg5[%c0_12, %c0_13] : memref<1x128xf32, #tpu.memory_space<vmem>>, vector<1x128xf32>
    %26 = vector.broadcast %25 : vector<1x128xf32> to vector<16x128xf32>
    %27 = arith.addf %24, %26 : vector<16x128xf32>
    %cst_14 = arith.constant 5.000000e-01 : f32
    %28 = vector.broadcast %cst_14 : f32 to vector<16x128xf32>
    %29 = arith.mulf %28, %27 : vector<16x128xf32>
    %cst_15 = arith.constant 0.707106769 : f32
    %30 = vector.broadcast %cst_15 : f32 to vector<16x128xf32>
    %31 = arith.mulf %27, %30 : vector<16x128xf32>
    %32 = math.erf %31 : vector<16x128xf32>
    %cst_16 = arith.constant 1.000000e+00 : f32
    %33 = vector.broadcast %cst_16 : f32 to vector<16x128xf32>
    %34 = arith.addf %33, %32 : vector<16x128xf32>
    %35 = arith.mulf %29, %34 : vector<16x128xf32>
    %c0_17 = arith.constant 0 : index
    %c0_18 = arith.constant 0 : index
    %36 = vector.load %arg6[%c0_17, %c0_18] : memref<128x32xf32, #tpu.memory_space<vmem>>, vector<128x32xf32>
    %cst_19 = arith.constant dense<0.000000e+00> : vector<16x32xf32>
    %37 = tpu.matmul %35, %36, %cst_19 {dimension_numbers = #tpu.dot_dimension_numbers<[1], [0], [0], [1], [0, 0, 1, 1], [], []>} : vector<16x128xf32>, vector<128x32xf32>, vector<16x32xf32> -> vector<16x32xf32>
    %c0_20 = arith.constant 0 : index
    %c0_21 = arith.constant 0 : index
    %38 = vector.load %arg7[%c0_20, %c0_21] : memref<1x32xf32, #tpu.memory_space<vmem>>, vector<1x32xf32>
    %39 = vector.broadcast %38 : vector<1x32xf32> to vector<16x32xf32>
    %40 = arith.addf %37, %39 : vector<16x32xf32>
    %41 = arith.addf %40, %0 : vector<16x32xf32>
    %c0_22 = arith.constant 0 : index
    %c0_23 = arith.constant 0 : index
    %42 = vector.load %arg8[%c0_22, %c0_23] : memref<16x32xf32, #tpu.memory_space<vmem>>, vector<16x32xf32>
    tpu.vector_store %arg8[%c0_22, %c0_23], %41 {strides = array<i32>} : memref<16x32xf32, #tpu.memory_space<vmem>>, vector<16x32xf32>,
    return
  }
  func.func @transform_0(%arg0: i32) -> (i32, i32) {
    %c0_i32 = arith.constant 0 : i32
    %c0_i32_0 = arith.constant 0 : i32
    return %arg0, %c0_i32 : i32, i32
  }
  func.func @transform_1(%arg0: i32) -> (i32, i32) {
    %c0_i32 = arith.constant 0 : i32
    %c0_i32_0 = arith.constant 0 : i32
    %c0_i32_1 = arith.constant 0 : i32
    return %c0_i32, %c0_i32_0 : i32, i32
  }
  func.func @transform_2(%arg0: i32) -> (i32, i32) {
    %c0_i32 = arith.constant 0 : i32
    %c0_i32_0 = arith.constant 0 : i32
    %c0_i32_1 = arith.constant 0 : i32
    return %c0_i32, %c0_i32_0 : i32, i32
  }
  func.func @transform_3(%arg0: i32) -> (i32, i32) {
    %c0_i32 = arith.constant 0 : i32
    %c0_i32_0 = arith.constant 0 : i32
    %c0_i32_1 = arith.constant 0 : i32
    return %c0_i32, %c0_i32_0 : i32, i32
  }
  func.func @transform_4(%arg0: i32) -> (i32, i32) {
    %c0_i32 = arith.constant 0 : i32
    %c0_i32_0 = arith.constant 0 : i32
    %c0_i32_1 = arith.constant 0 : i32
    return %c0_i32, %c0_i32_0 : i32, i32
  }
  func.func @transform_5(%arg0: i32) -> (i32, i32) {
    %c0_i32 = arith.constant 0 : i32
    %c0_i32_0 = arith.constant 0 : i32
    %c0_i32_1 = arith.constant 0 : i32
    return %c0_i32, %c0_i32_0 : i32, i32
  }
  func.func @transform_6(%arg0: i32) -> (i32, i32) {
    %c0_i32 = arith.constant 0 : i32
    %c0_i32_0 = arith.constant 0 : i32
    %c0_i32_1 = arith.constant 0 : i32
    return %c0_i32, %c0_i32_0 : i32, i32
  }
  func.func @transform_7(%arg0: i32) -> (i32, i32) {
    %c0_i32 = arith.constant 0 : i32
    %c0_i32_0 = arith.constant 0 : i32
    return %arg0, %c0_i32 : i32, i32
  }
}

</mosaic_0001>

<llo_original>
// kernel: tpu_custom_call.1
$region0: #{tpu_custom_call.1}
  #allocation0 [shape = 'u32[]', space=smem, size = 0x4, offset = 0x4, fixed_abs, tag = 'smem constant byte address 0x4 - core index']
  #allocation1 [shape = 'u32[144,128]{1,0:T(1,128)}', space=vmem, size = 0x12000, scoped, tag = 'internal scratch']
  %s0 = inlined_call_operand.vmem [shape: f32[16,32], index: 0, kind: input, shape index: {}]
  %s1 = inlined_call_operand.vmem [shape: f32[1,32], index: 1, kind: input, shape index: {}]
  %s2 = inlined_call_operand.vmem [shape: f32[1,32], index: 2, kind: input, shape index: {}]
  %s3 = inlined_call_operand.vmem [shape: f32[32,128], index: 3, kind: input, shape index: {}]
  %s4 = inlined_call_operand.vmem [shape: f32[1,128], index: 4, kind: input, shape index: {}]
  %s5 = inlined_call_operand.vmem [shape: f32[128,32], index: 5, kind: input, shape index: {}]
  %s6 = inlined_call_operand.vmem [shape: f32[1,32], index: 6, kind: input, shape index: {}]
  %s7 = inlined_call_operand.hbm [shape: f32[16,32], index: 7, kind: output, shape index: {}]
  %s8 = sld [smem:[#allocation0]]
  $region38: #{tpu_custom_call.1} parent=0
    _
  %s10 = ssub.s32 1, %s8
  %s11 = scalar_select 0, %s10, %s8
  $region1: #{tpu_custom_call.1} parent=0
    #allocation2 [shape = 'u8[8192]{0}', space=vmem, size = 0x2000, scoped, tag = 'output window, operand 0, single buffered']
    #allocation3 [shape = 's32[1]{0}', space=sflag, size = 0x4, scoped, tag = 'scoped memory for tpu_custom_call.1']
    %12 = vsyncpa [#allocation3], 0
    // Predicated region
    $region2: #{tpu_custom_call.1} parent=1 // pred_check
      _
    $region3: #{tpu_custom_call.1} parent=1 // pred_check_branch
      %14 = sbr.rel (0) target = $region5
    $region4: #{tpu_custom_call.1} parent=1 // pred_region
      _
    $region5: #{tpu_custom_call.1} parent=1 // pred_fallthru
      _
    // Predicated region
    $region6: #{tpu_custom_call.1} parent=1 // pred_check
      _
    $region7: #{tpu_custom_call.1} parent=1 // pred_check_branch
      %16 = sbr.rel (0) target = $region9
    $region8: #{tpu_custom_call.1} parent=1 // pred_region
      _
    $region9: #{tpu_custom_call.1} parent=1 // pred_fallthru
      _
    // Predicated region
    $region10: #{tpu_custom_call.1} parent=1 // pred_check
      _
    $region11: #{tpu_custom_call.1} parent=1 // pred_check_branch
      %18 = sbr.rel (0) target = $region13
    $region12: #{tpu_custom_call.1} parent=1 // pred_region
      _
    $region13: #{tpu_custom_call.1} parent=1 // pred_fallthru
      _
    // Predicated region
    $region14: #{tpu_custom_call.1} parent=1 // pred_check
      _
    $region15: #{tpu_custom_call.1} parent=1 // pred_check_branch
      %20 = sbr.rel (0) target = $region17
    $region16: #{tpu_custom_call.1} parent=1 // pred_region
      _
    $region17: #{tpu_custom_call.1} parent=1 // pred_fallthru
      _
    // Predicated region
    $region18: #{tpu_custom_call.1} parent=1 // pred_check
      _
    $region19: #{tpu_custom_call.1} parent=1 // pred_check_branch
      %22 = sbr.rel (0) target = $region21
    $region20: #{tpu_custom_call.1} parent=1 // pred_region
      _
    $region21: #{tpu_custom_call.1} parent=1 // pred_fallthru
      _
    // Predicated region
    $region22: #{tpu_custom_call.1} parent=1 // pred_check
      _
    $region23: #{tpu_custom_call.1} parent=1 // pred_check_branch
      %24 = sbr.rel (0) target = $region25
    $region24: #{tpu_custom_call.1} parent=1 // pred_region
      _
    $region25: #{tpu_custom_call.1} parent=1 // pred_fallthru
      _
    // Predicated region
    $region26: #{tpu_custom_call.1} parent=1 // pred_check
      _
    $region27: #{tpu_custom_call.1} parent=1 // pred_check_branch
      %26 = sbr.rel (0) target = $region29
    $region28: #{tpu_custom_call.1} parent=1 // pred_region
      _
    $region29: #{tpu_custom_call.1} parent=1 // pred_fallthru
      _
    %v27 = vld [vmem:[%s0] sm:$0xff]
    %v28 = vld [vmem:[%s0 + $0x8] sm:$0xff]
    %vm29 = vcmask 261120
    %v30 = vsel %vm29, %v27, 0.0
    %31 = vadd.xlane.f32.xlu0 %v30
    %v32 = vpop.xlane.xlu0 %31
    %v33 = vsel %vm29, %v28, 0.0
    %34 = vadd.xlane.f32.xlu0 %v33
    %v35 = vpop.xlane.xlu0 %34
    %v36 = vrcp.pop 32.0
    %v37 = vmul.f32 %v32, %v36
    %v38 = vmul.f32 %v35, %v36
    %v39 = vsub.f32 %v27, %v37
    %v40 = vsub.f32 %v28, %v38
    %v41 = vmul.f32 %v39, %v39
    %v42 = vmul.f32 %v40, %v40
    %v43 = vsel %vm29, %v41, 0.0
    %44 = vadd.xlane.f32.xlu0 %v43
    %v45 = vpop.xlane.xlu0 %44
    %v46 = vsel %vm29, %v42, 0.0
    %47 = vadd.xlane.f32.xlu0 %v46
    %v48 = vpop.xlane.xlu0 %47
    %v49 = vmul.f32 %v45, %v36
    %v50 = vmul.f32 %v48, %v36
    %v51 = vadd.f32 %v49, 1e-05
    %v52 = vadd.f32 %v50, 1e-05
    %v53 = vrsqrt.pop %v51
    %v54 = vrsqrt.pop %v52
    %v55 = vmul.f32 %v39, %v53
    %v56 = vmul.f32 %v40, %v54
    %v57 = vld [vmem:[%s1] sm:$0x1]
    %v59 = vlaneseq
    %v60 = vshrl.u32 %v59, 7
    %v61 = vsub.s32 0, %v60
    %v62 = vrot.slane %v57, %v61
    %v64 = vmul.f32 %v55, %v62
    %v65 = vmul.f32 %v56, %v62
    %v66 = vld [vmem:[%s2] sm:$0x1]
    %v68 = vlaneseq
    %v69 = vshrl.u32 %v68, 7
    %v70 = vsub.s32 0, %v69
    %v71 = vrot.slane %v66, %v70
    %v73 = vadd.f32 %v64, %v71
    %v74 = vadd.f32 %v65, %v71
    %v75 = vld [vmem:[%s3] sm:$0xff]
    %v76 = vld [vmem:[%s3 + $0x8] sm:$0xff]
    %v77 = vld [vmem:[%s3 + $0x10] sm:$0xff]
    %v78 = vld [vmem:[%s3 + $0x18] sm:$0xff]
    %v79 = vld [vmem:[%s4] sm:$0x1]
    %v81 = vlaneseq
    %v82 = vshrl.u32 %v81, 7
    %v83 = vsub.s32 0, %v82
    %v84 = vrot.slane %v79, %v83
    %v87 = vsel %vm29, %v73, 0
    %v90 = vsel %vm29, %v74, 0
    %92 = vmatprep.subr.mxu0 0.0
    %93 = vmatpush1.msra.mxu0 0.0
    %94 = vmatprep.subr.mxu0 0.0
    %95 = vmatpush1.msra.mxu0 0.0
    %96 = vmatprep.subr.mxu0 0.0
    %97 = vmatpush1.msra.mxu0 0.0
    %98 = vmatprep.subr.mxu0 0.0
    %99 = vmatpush1.msra.mxu0 0.0
    %100 = vmatprep.subr.mxu0 0.0
    %101 = vmatpush1.msra.mxu0 0.0
    %102 = vmatprep.subr.mxu0 0.0
    %103 = vmatpush1.msra.mxu0 0.0
    %104 = vmatprep.subr.mxu0 0.0
    %105 = vmatpush1.msra.mxu0 0.0
    %106 = vmatprep.subr.mxu0 0.0
    %107 = vmatpush1.msra.mxu0 0.0
    %108 = vmatprep.subr.mxu0 0.0
    %109 = vmatpush1.msra.mxu0 0.0
    %110 = vmatprep.subr.mxu0 0.0
    %111 = vmatpush1.msra.mxu0 0.0
    %112 = vmatprep.subr.mxu0 0.0
    %113 = vmatpush1.msra.mxu0 0.0
    %114 = vmatprep.subr.mxu0 0.0
    %115 = vmatpush1.msra.mxu0 0.0
    %116 = vmatprep.subr.mxu0 0.0
    %117 = vmatpush1.msra.mxu0 %v78
    %118 = vmatprep.subr.mxu0 0.0
    %119 = vmatpush1.msra.mxu0 %v77
    %120 = vmatprep.subr.mxu0 0.0
    %121 = vmatpush1.msra.mxu0 %v76
    %122 = vmatprep.subr.mxu0 0.0
    %123 = vmatpush1.msra.mxu0 %v75
    %124 = vmatprep.subr.mxu0 0.0
    %125 = vmatpush2.msra.mxu0 0.0
    %126 = vmatprep.subr.mxu0 0.0
    %127 = vmatpush2.msra.mxu0 0.0
    %128 = vmatprep.subr.mxu0 0.0
    %129 = vmatpush2.msra.mxu0 0.0
    %130 = vmatprep.subr.mxu0 0.0
    %131 = vmatpush2.msra.mxu0 0.0
    %132 = vmatprep.subr.mxu0 0.0
    %133 = vmatpush2.msra.mxu0 0.0
    %134 = vmatprep.subr.mxu0 0.0
    %135 = vmatpush2.msra.mxu0 0.0
    %136 = vmatprep.subr.mxu0 0.0
    %137 = vmatpush2.msra.mxu0 0.0
    %138 = vmatprep.subr.mxu0 0.0
    %139 = vmatpush2.msra.mxu0 0.0
    %140 = vmatprep.subr.mxu0 0.0
    %141 = vmatpush2.msra.mxu0 0.0
    %142 = vmatprep.subr.mxu0 0.0
    %143 = vmatpush2.msra.mxu0 0.0
    %144 = vmatprep.subr.mxu0 0.0
    %145 = vmatpush2.msra.mxu0 0.0
    %146 = vmatprep.subr.mxu0 0.0
    %147 = vmatpush2.msra.mxu0 0.0
    %148 = vmatprep.subr.mxu0 0.0
    %149 = vmatpush2.msra.mxu0 0.0
    %150 = vmatprep.subr.mxu0 0.0
    %151 = vmatpush2.msra.mxu0 0.0
    %152 = vmatprep.subr.mxu0 0.0
    %153 = vmatpush2.msra.mxu0 0.0
    %154 = vmatprep.subr.mxu0 0.0
    %155 = vmatpush2.msra.mxu0 0.0
    %156 = vmatprep.mubr.f32.mxu0 0.0
    %157 = vmatmul.mubr.f32.gmra.mxu0 %v87
    %v158 = vpop.f32.mrf.mxu0
    %v159 = vadd.f32 %v84, %v158
    %v160 = vpop.f32.mrf.mxu0
    %161 = vmatprep.mubr.f32.mxu0 0.0
    %162 = vmatmul.mubr.f32.gmra.mxu0 %v90
    %v163 = vpop.f32.mrf.mxu0
    %v164 = vadd.f32 %v84, %v163
    %v165 = vpop.f32.mrf.mxu0
    %166 = vdwg.mxu0
    %v167 = vmul.f32 %v159, 0.5
    %v168 = vmul.f32 %v164, 0.5
    %v169 = vmul.f32 %v159, 0.70710677
    %v170 = vmul.f32 %v164, 0.70710677
    %v171 = verf.f32.pop %v169
    %v172 = verf.f32.pop %v170
    %v173 = vadd.f32 %v171, 1.0
    %v174 = vadd.f32 %v172, 1.0
    %v175 = vmul.f32 %v167, %v173
    %v176 = vmul.f32 %v168, %v174
    %v177 = vld [vmem:[%s5] sm:$0xff]
    %v178 = vld [vmem:[%s5 + $0x8] sm:$0xff]
    %v179 = vld [vmem:[%s5 + $0x10] sm:$0xff]
    %v180 = vld [vmem:[%s5 + $0x18] sm:$0xff]
    %v181 = vld [vmem:[%s5 + $0x20] sm:$0xff]
    %v182 = vld [vmem:[%s5 + $0x28] sm:$0xff]
    %v183 = vld [vmem:[%s5 + $0x30] sm:$0xff]
    %v184 = vld [vmem:[%s5 + $0x38] sm:$0xff]
    %v185 = vld [vmem:[%s5 + $0x40] sm:$0xff]
    %v186 = vld [vmem:[%s5 + $0x48] sm:$0xff]
    %v187 = vld [vmem:[%s5 + $0x50] sm:$0xff]
    %v188 = vld [vmem:[%s5 + $0x58] sm:$0xff]
    %v189 = vld [vmem:[%s5 + $0x60] sm:$0xff]
    %v190 = vld [vmem:[%s5 + $0x68] sm:$0xff]
    %v191 = vld [vmem:[%s5 + $0x70] sm:$0xff]
    %v192 = vld [vmem:[%s5 + $0x78] sm:$0xff]
    %v193 = vld [vmem:[%s6] sm:$0x1]
    %v195 = vlaneseq
    %v196 = vshrl.u32 %v195, 7
    %v197 = vsub.s32 0, %v196
    %v198 = vrot.slane %v193, %v197
    %200 = vmatprep.subr.mxu0 0.0
    %201 = vmatpush1.msra.mxu0 %v192
    %202 = vmatprep.subr.mxu0 0.0
    %203 = vmatpush1.msra.mxu0 %v191
    %204 = vmatprep.subr.mxu0 0.0
    %205 = vmatpush1.msra.mxu0 %v190
    %206 = vmatprep.subr.mxu0 0.0
    %207 = vmatpush1.msra.mxu0 %v189
    %208 = vmatprep.subr.mxu0 0.0
    %209 = vmatpush1.msra.mxu0 %v188
    %210 = vmatprep.subr.mxu0 0.0
    %211 = vmatpush1.msra.mxu0 %v187
    %212 = vmatprep.subr.mxu0 0.0
    %213 = vmatpush1.msra.mxu0 %v186
    %214 = vmatprep.subr.mxu0 0.0
    %215 = vmatpush1.msra.mxu0 %v185
    %216 = vmatprep.subr.mxu0 0.0
    %217 = vmatpush1.msra.mxu0 %v184
    %218 = vmatprep.subr.mxu0 0.0
    %219 = vmatpush1.msra.mxu0 %v183
    %220 = vmatprep.subr.mxu0 0.0
    %221 = vmatpush1.msra.mxu0 %v182
    %222 = vmatprep.subr.mxu0 0.0
    %223 = vmatpush1.msra.mxu0 %v181
    %224 = vmatprep.subr.mxu0 0.0
    %225 = vmatpush1.msra.mxu0 %v180
    %226 = vmatprep.subr.mxu0 0.0
    %227 = vmatpush1.msra.mxu0 %v179
    %228 = vmatprep.subr.mxu0 0.0
    %229 = vmatpush1.msra.mxu0 %v178
    %230 = vmatprep.subr.mxu0 0.0
    %231 = vmatpush1.msra.mxu0 %v177
    %232 = vmatprep.subr.mxu0 0.0
    %233 = vmatpush2.msra.mxu0 0.0
    %234 = vmatprep.subr.mxu0 0.0
    %235 = vmatpush2.msra.mxu0 0.0
    %236 = vmatprep.subr.mxu0 0.0
    %237 = vmatpush2.msra.mxu0 0.0
    %238 = vmatprep.subr.mxu0 0.0
    %239 = vmatpush2.msra.mxu0 0.0
    %240 = vmatprep.subr.mxu0 0.0
    %241 = vmatpush2.msra.mxu0 0.0
    %242 = vmatprep.subr.mxu0 0.0
    %243 = vmatpush2.msra.mxu0 0.0
    %244 = vmatprep.subr.mxu0 0.0
    %245 = vmatpush2.msra.mxu0 0.0
    %246 = vmatprep.subr.mxu0 0.0
    %247 = vmatpush2.msra.mxu0 0.0
    %248 = vmatprep.subr.mxu0 0.0
    %249 = vmatpush2.msra.mxu0 0.0
    %250 = vmatprep.subr.mxu0 0.0
    %251 = vmatpush2.msra.mxu0 0.0
    %252 = vmatprep.subr.mxu0 0.0
    %253 = vmatpush2.msra.mxu0 0.0
    %254 = vmatprep.subr.mxu0 0.0
    %255 = vmatpush2.msra.mxu0 0.0
    %256 = vmatprep.subr.mxu0 0.0
    %257 = vmatpush2.msra.mxu0 0.0
    %258 = vmatprep.subr.mxu0 0.0
    %259 = vmatpush2.msra.mxu0 0.0
    %260 = vmatprep.subr.mxu0 0.0
    %261 = vmatpush2.msra.mxu0 0.0
    %262 = vmatprep.subr.mxu0 0.0
    %263 = vmatpush2.msra.mxu0 0.0
    %264 = vmatprep.mubr.f32.mxu0 0.0
    %265 = vmatmul.mubr.f32.gmra.mxu0 %v175
    %v266 = vpop.f32.mrf.mxu0
    %v267 = vadd.f32 %v198, %v266
    %v268 = vpop.f32.mrf.mxu0
    %269 = vmatprep.mubr.f32.mxu0 0.0
    %270 = vmatmul.mubr.f32.gmra.mxu0 %v176
    %v271 = vpop.f32.mrf.mxu0
    %v272 = vadd.f32 %v198, %v271
    %v273 = vpop.f32.mrf.mxu0
    %274 = vdwg.mxu0
    %v275 = vadd.f32 %v267, %v27
    %v276 = vadd.f32 %v272, %v28
    %277 = vst.msk [vmem:[#allocation2] sm:$0xff] %vm29, %v275
    %278 = vst.msk [vmem:[#allocation2 + $0x8] sm:$0xff] %vm29, %v276
    // Predicated region
    $region30: #{tpu_custom_call.1} parent=1 // pred_check
      _
    $region31: #{tpu_custom_call.1} parent=1 // pred_check_branch
      %280 = sbr.rel (0) target = $region33
    $region32: #{tpu_custom_call.1} parent=1 // pred_region
      %s282 = ssub.s32 256, 256
      %283 = vsyncadd [#allocation3], %s282
      %s284 = sshll.u32 [#allocation2], 4
      %s285 = int_to_ptr.vmem [resolvable:$true] %s284
      %290 = dma.vmem_to_hbm [thread:$0]  %s285, 256, %s7, [#allocation3], 128, 128, 8
    $region33: #{tpu_custom_call.1} parent=1 // pred_fallthru
      _
    // Predicated region
    $region34: #{tpu_custom_call.1} parent=1 // pred_check
      _
    $region35: #{tpu_custom_call.1} parent=1 // pred_check_branch
      %292 = sbr.rel (0) target = $region37
    $region36: #{tpu_custom_call.1} parent=1 // pred_region
      %293 = dma.done [#allocation3], 256
    $region37: #{tpu_custom_call.1} parent=1 // pred_fallthru
      _
    %294 = vsyncpa [#allocation3], 1

</llo_original>
